<compile_context>
chip_gen: v5e
topology: v5e:2x2
jax: 0.10.0
libtpu: 0.0.40
codegen_flags: <defaults>
</compile_context>

<pallas_src>
import jax
import jax.numpy as jnp
from jax.experimental import pallas as pl
from jax.experimental.pallas import tpu as pltpu


def _round_up(x, m):
    return ((x + m - 1) // m) * m


# ---------------------------------------------------------------------------
# Kernels
# ---------------------------------------------------------------------------
def _mlp_fused_kernel(x_ref, w1_ref, b1_ref, w2m_ref, b2m_ref, o_ref):
    # relu(x @ W1 + b1) @ (W2 @ Wm) + (b2 @ Wm): two MXU matmuls per batch tile.
    x = x_ref[...]
    h = jnp.dot(x, w1_ref[...], preferred_element_type=jnp.float32) + b1_ref[...]
    h = jnp.maximum(h, 0.0)                                   # ReLU
    z = (jnp.dot(h.astype(w2m_ref.dtype), w2m_ref[...],
                 preferred_element_type=jnp.float32) + b2m_ref[...])
    o_ref[...] = z.astype(o_ref.dtype)


def _mlp_unfused_kernel(x_ref, w1_ref, b1_ref, w2_ref, b2_ref, wm_ref, o_ref):
    # Used when P > O would make the algebraic fusion more expensive.
    x = x_ref[...]
    h = jnp.dot(x, w1_ref[...], preferred_element_type=jnp.float32) + b1_ref[...]
    h = jnp.maximum(h, 0.0)
    y = (jnp.dot(h.astype(w2_ref.dtype), w2_ref[...],
                 preferred_element_type=jnp.float32) + b2_ref[...])
    z = jnp.dot(y.astype(wm_ref.dtype), wm_ref[...],
                preferred_element_type=jnp.float32)
    o_ref[...] = z.astype(o_ref.dtype)


# ---------------------------------------------------------------------------
# One-time parameter preparation (call once, not per forward)
# ---------------------------------------------------------------------------
def prepare_params(w1_t, b1, w2_t, b2, wm_t, compute_dtype=None):
    """w1_t: (I, H); b1: (1, H); w2_t: (H, O); b2: (1, O); wm_t: (O, P).

    Fuses fc2 + mapper when it does not increase flops, and optionally casts
    the matmul operands to `compute_dtype` (e.g. bf16 for v6e/v7x MXU peak).
    Biases stay in their original dtype; accumulation in-kernel is f32."""
    H, O = w2_t.shape
    P = wm_t.shape[1]
    fuse = H * P <= H * O + O * P
    cast = (lambda a: a.astype(compute_dtype)) if compute_dtype is not None else (lambda a: a)
    if fuse:
        w2m = jnp.dot(w2_t, wm_t)          # (H, P)
        b2m = jnp.dot(b2, wm_t)            # (1, P)
        return True, (cast(w1_t), b1, cast(w2m), b2m)
    return False, (cast(w1_t), b1, cast(w2_t), b2, cast(wm_t))


# ---------------------------------------------------------------------------
# Forward wrapper
# ---------------------------------------------------------------------------
def mlp_dynamic_forward(x, params, *, tm=512):
    """x: (B, I); params: output of prepare_params(). Returns (B, P)."""
    fuse, mats = params
    w1 = mats[0]
    B, I = x.shape
    H = w1.shape[1]
    P = mats[2].shape[1] if fuse else mats[4].shape[1]
    out_dtype = x.dtype

    xc = x.astype(w1.dtype)                # compute dtype of the matmuls
    in_itemsize = jnp.dtype(w1.dtype).itemsize
    out_itemsize = jnp.dtype(out_dtype).itemsize

    # --- batch tile selection (only batch is ever padded) ------------------
    Bp8 = _round_up(B, 8)
    tm_eff = min(_round_up(tm, 8), Bp8)
    # Guarantee >= 2 grid steps when batch allows: lets the "parallel" axis
    # shard across v7x's two TensorCores and enables input/output pipelining.
    if Bp8 // tm_eff < 2 and Bp8 >= 16:
        tm_eff = _round_up((Bp8 + 1) // 2, 8)

    # --- generation-aware VMEM budget ---------------------------------------
    try:
        vmem_cap = int(pltpu.get_tpu_info().vmem_capacity_bytes)
    except Exception:
        vmem_cap = 128 * 1024 * 1024
    budget = int(0.8 * vmem_cap)
    w_bytes = sum(int(m.size) * jnp.dtype(m.dtype).itemsize for m in mats)

    def vmem_needed(t):
        # double-buffered x tile + resident weights/biases + double-buffered out
        return 2 * t * I * in_itemsize + w_bytes + 2 * t * P * out_itemsize

    while vmem_needed(tm_eff) > budget and tm_eff > 8:
        tm_eff = max(8, _round_up(tm_eff // 2, 8))
    # TODO(synk): if the resident weights alone exceed the VMEM budget (huge
    # I/H on v7x's 64 MiB), switch to a K-tiled (batch, K) grid with an f32
    # accumulator instead of only shrinking the batch tile.

    Bp = _round_up(B, tm_eff)
    xp = xc if Bp == B else jnp.zeros((Bp, I), xc.dtype).at[:B].set(xc)
    grid = (Bp // tm_eff,)

    def resident(shape):
        # Grid-invariant operand: constant index map + single buffer (no
        # pointless double-buffering of weights that never change per step).
        return pl.BlockSpec(shape, lambda i: (0, 0),
                            pipeline_mode=pl.Buffered(buffer_count=1))

    in_specs = [pl.BlockSpec((tm_eff, I), lambda i: (i, 0))]   # x tile over batch
    in_specs += [resident(m.shape) for m in mats]              # weights / biases

    if fuse:
        kernel = _mlp_fused_kernel
        flops = 2 * Bp * (I * H + H * P)
    else:
        kernel = _mlp_unfused_kernel
        O = mats[2].shape[1]
        flops = 2 * Bp * (I * H + H * O + O * P)
    bytes_accessed = Bp * I * in_itemsize + w_bytes + Bp * P * out_itemsize
    vmem_limit = int(min(max(2 * vmem_needed(tm_eff), 32 * 1024 * 1024), budget))

    out = pl.pallas_call(
        kernel,
        out_shape=jax.ShapeDtypeStruct((Bp, P), out_dtype),
        grid_spec=pltpu.PrefetchScalarGridSpec(
            num_scalar_prefetch=0,
            grid=grid,
            in_specs=in_specs,
            out_specs=pl.BlockSpec((tm_eff, P), lambda i: (i, 0)),
        ),
        compiler_params=pltpu.CompilerParams(
            dimension_semantics=("parallel",),
            vmem_limit_bytes=vmem_limit,
        ),
        cost_estimate=pl.CostEstimate(
            flops=int(flops), transcendentals=0,
            bytes_accessed=int(bytes_accessed)),
    )(xp, *mats)

    return out[:B] if Bp != B else out


def reference_forward(x, w1_t, b1, w2_t, b2, wm_t):
    h = jnp.maximum(x @ w1_t + b1, 0.0)
    return (h @ w2_t + b2) @ wm_t


if __name__ == "__main__":
    # Small shapes consistent with the module's forward (pure MLP on last dim).
    batch = 16
    input_size = 64
    hidden_size = 32
    output_size = 8
    projected_output_size = 4

    key = jax.random.PRNGKey(0)
    kx, k1, kb1, k2, kb2, km = jax.random.split(key, 6)

    x = jax.random.normal(kx, (batch, input_size), dtype=jnp.float32)

    # PyTorch stores weight as (out, in); build directly in the transposed
    # (in, out) layout the kernel uses (identical math to x @ W.T + b).
    w1_t = jax.random.normal(k1, (input_size, hidden_size), dtype=jnp.float32) * 0.05
    b1 = jax.random.normal(kb1, (1, hidden_size), dtype=jnp.float32) * 0.05
    w2_t = jax.random.normal(k2, (hidden_size, output_size), dtype=jnp.float32) * 0.05
    b2 = jax.random.normal(kb2, (1, output_size), dtype=jnp.float32) * 0.05
    wm_t = jax.random.normal(km, (output_size, projected_output_size),
                             dtype=jnp.float32) * 0.05

    # One-time prep (fc2+mapper fusion + optional compute-dtype cast).
    # Use f32 here so the numeric check vs. the reference is tight; pass
    # compute_dtype=jnp.bfloat16 for the v6e/v7x MXU-bound regime.
    params = prepare_params(w1_t, b1, w2_t, b2, wm_t, compute_dtype=None)

    out = mlp_dynamic_forward(x, params, tm=512)
    out = jax.block_until_ready(out)

    ref = reference_forward(x, w1_t, b1, w2_t, b2, wm_t)
    assert out.shape == (batch, projected_output_size)
    # Fusion of fc2+mapper changes FP associativity slightly; tolerance covers it.
    assert jnp.allclose(out, ref, atol=1e-5, rtol=1e-4), "mismatch vs reference"

    print("KERNEL_OK")
</pallas_src>

<mosaic_0001>
module attributes {stable_mosaic.version = 11 : i64} {
  func.func @_mlp_fused_kernel(%arg0: i32, %arg1: memref<8x64xf32, #tpu.memory_space<vmem>>, %arg2: memref<64x32xf32, #tpu.memory_space<vmem>>, %arg3: memref<1x32xf32, #tpu.memory_space<vmem>>, %arg4: memref<32x4xf32, #tpu.memory_space<vmem>>, %arg5: memref<1x4xf32, #tpu.memory_space<vmem>>, %arg6: memref<8x4xf32, #tpu.memory_space<vmem>>) attributes {dimension_semantics = [#tpu.dimension_semantics<parallel>], iteration_bounds = array<i64: 2>, scalar_prefetch = 0 : i64, scratch_operands = 0 : i64, tpu.core_type = #tpu.core_type<tc>, window_params = [{transform_indices = @transform_0, window_bounds = array<i64: 8, 64>}, {pipeline_mode = #tpu.pipeline_mode<synchronous>, transform_indices = @transform_1, window_bounds = array<i64: 64, 32>}, {pipeline_mode = #tpu.pipeline_mode<synchronous>, transform_indices = @transform_2, window_bounds = array<i64: 1, 32>}, {pipeline_mode = #tpu.pipeline_mode<synchronous>, transform_indices = @transform_3, window_bounds = array<i64: 32, 4>}, {pipeline_mode = #tpu.pipeline_mode<synchronous>, transform_indices = @transform_4, window_bounds = array<i64: 1, 4>}, {transform_indices = @transform_5, window_bounds = array<i64: 8, 4>}]} {
    %c0 = arith.constant 0 : index
    %c0_0 = arith.constant 0 : index
    %0 = vector.load %arg1[%c0, %c0_0] : memref<8x64xf32, #tpu.memory_space<vmem>>, vector<8x64xf32>
    %c0_1 = arith.constant 0 : index
    %c0_2 = arith.constant 0 : index
    %1 = vector.load %arg2[%c0_1, %c0_2] : memref<64x32xf32, #tpu.memory_space<vmem>>, vector<64x32xf32>
    %cst = arith.constant dense<0.000000e+00> : vector<8x32xf32>
    %2 = tpu.matmul %0, %1, %cst {dimension_numbers = #tpu.dot_dimension_numbers<[1], [0], [0], [1], [0, 0, 1, 1], [], []>} : vector<8x64xf32>, vector<64x32xf32>, vector<8x32xf32> -> vector<8x32xf32>
    %c0_3 = arith.constant 0 : index
    %c0_4 = arith.constant 0 : index
    %3 = vector.load %arg3[%c0_3, %c0_4] : memref<1x32xf32, #tpu.memory_space<vmem>>, vector<1x32xf32>
    %4 = vector.broadcast %3 : vector<1x32xf32> to vector<8x32xf32>
    %5 = arith.addf %2, %4 : vector<8x32xf32>
    %cst_5 = arith.constant 0.000000e+00 : f32
    %6 = vector.broadcast %cst_5 : f32 to vector<8x32xf32>
    %7 = arith.maximumf %5, %6 : vector<8x32xf32>
    %c0_6 = arith.constant 0 : index
    %c0_7 = arith.constant 0 : index
    %8 = vector.load %arg4[%c0_6, %c0_7] : memref<32x4xf32, #tpu.memory_space<vmem>>, vector<32x4xf32>
    %cst_8 = arith.constant dense<0.000000e+00> : vector<8x4xf32>
    %9 = tpu.matmul %7, %8, %cst_8 {dimension_numbers = #tpu.dot_dimension_numbers<[1], [0], [0], [1], [0, 0, 1, 1], [], []>} : vector<8x32xf32>, vector<32x4xf32>, vector<8x4xf32> -> vector<8x4xf32>
    %c0_9 = arith.constant 0 : index
    %c0_10 = arith.constant 0 : index
    %10 = vector.load %arg5[%c0_9, %c0_10] : memref<1x4xf32, #tpu.memory_space<vmem>>, vector<1x4xf32>
    %11 = vector.broadcast %10 : vector<1x4xf32> to vector<8x4xf32>
    %12 = arith.addf %9, %11 : vector<8x4xf32>
    %c0_11 = arith.constant 0 : index
    %c0_12 = arith.constant 0 : index
    %13 = vector.load %arg6[%c0_11, %c0_12] : memref<8x4xf32, #tpu.memory_space<vmem>>, vector<8x4xf32>
    tpu.vector_store %arg6[%c0_11, %c0_12], %12 {strides = array<i32>} : memref<8x4xf32, #tpu.memory_space<vmem>>, vector<8x4xf32>,
    return
  }
  func.func @transform_0(%arg0: i32) -> (i32, i32) {
    %c0_i32 = arith.constant 0 : i32
    %c0_i32_0 = arith.constant 0 : i32
    return %arg0, %c0_i32 : i32, i32
  }
  func.func @transform_1(%arg0: i32) -> (i32, i32) {
    %c0_i32 = arith.constant 0 : i32
    %c0_i32_0 = arith.constant 0 : i32
    %c0_i32_1 = arith.constant 0 : i32
    return %c0_i32, %c0_i32_0 : i32, i32
  }
  func.func @transform_2(%arg0: i32) -> (i32, i32) {
    %c0_i32 = arith.constant 0 : i32
    %c0_i32_0 = arith.constant 0 : i32
    %c0_i32_1 = arith.constant 0 : i32
    return %c0_i32, %c0_i32_0 : i32, i32
  }
  func.func @transform_3(%arg0: i32) -> (i32, i32) {
    %c0_i32 = arith.constant 0 : i32
    %c0_i32_0 = arith.constant 0 : i32
    %c0_i32_1 = arith.constant 0 : i32
    return %c0_i32, %c0_i32_0 : i32, i32
  }
  func.func @transform_4(%arg0: i32) -> (i32, i32) {
    %c0_i32 = arith.constant 0 : i32
    %c0_i32_0 = arith.constant 0 : i32
    %c0_i32_1 = arith.constant 0 : i32
    return %c0_i32, %c0_i32_0 : i32, i32
  }
  func.func @transform_5(%arg0: i32) -> (i32, i32) {
    %c0_i32 = arith.constant 0 : i32
    %c0_i32_0 = arith.constant 0 : i32
    return %arg0, %c0_i32 : i32, i32
  }
}

</mosaic_0001>

<llo_original>
// kernel: tpu_custom_call.1
$region0: #{tpu_custom_call.1}
  #allocation0 [shape = 'u32[]', space=smem, size = 0x4, offset = 0x4, fixed_abs, tag = 'smem constant byte address 0x4 - core index']
  #allocation1 [shape = 'u32[72,128]{1,0:T(1,128)}', space=vmem, size = 0x9000, scoped, tag = 'internal scratch']
  %s0 = inlined_call_operand.vmem [shape: f32[16,64], index: 0, kind: input, shape index: {}]
  %s1 = inlined_call_operand.vmem [shape: f32[64,32], index: 1, kind: input, shape index: {}]
  %s2 = inlined_call_operand.vmem [shape: f32[1,32], index: 2, kind: input, shape index: {}]
  %s3 = inlined_call_operand.vmem [shape: f32[32,4], index: 3, kind: input, shape index: {}]
  %s4 = inlined_call_operand.vmem [shape: f32[1,4], index: 4, kind: input, shape index: {}]
  %s5 = inlined_call_operand.vmem [shape: f32[16,4], index: 5, kind: output, shape index: {}]
  %s6 = sld [smem:[#allocation0]]
  $region53: #{tpu_custom_call.1} parent=0
    _
  %s8 = ssub.s32 1, %s6
  %s9 = scalar_select 0, %s8, %s6
  loop: start=0, step=1, limit=4
  $region2: #{tpu_custom_call.1} parent=0 // loop_pre_header
    _
  $region3: #{tpu_custom_call.1} parent=0 // loop_header
    %s11 = sphi 0, %s15
    %p12 = scmp.ge.s32.totalorder %s11, 4
    %s21 = sphi 0, %s23
    %s24 = sphi 0, %s21
    %s25 = sphi 0, %s24
    %s41 = sphi 0, %s25
    %s45 = sphi 0, %s45
    %s47 = sphi 0, %s45
    %s48 = sphi 0, %s47
    %s62 = sphi 0, %s48
    %s66 = sphi 0, %s66
    %s68 = sphi 0, %s66
    %s69 = sphi 0, %s68
    %s83 = sphi 0, %s69
    %s87 = sphi 0, %s87
    %s89 = sphi 0, %s87
    %s90 = sphi 0, %s89
    %s104 = sphi 0, %s90
    %s108 = sphi 0, %s108
    %s110 = sphi 0, %s108
    %s111 = sphi 0, %s110
    %s125 = sphi 0, %s111
    %s131 = sphi 0, %s133
    %s134 = sphi 0, %s131
    %s135 = sphi 0, %s134
    %s151 = sphi 0, %s135
  $region4: #{tpu_custom_call.1} parent=0 // loop_header_branch
    %14 = sbr.rel (%p12) target = $region8
  $region5: #{tpu_custom_call.1} parent=0 // loop_body
    %s16 = ssub.s32 %s11, 1
    %s17 = ssub.s32 %s11, 2
    %s18 = sadd.s32 %s11, 1
    %s19 = ssub.s32 %s11, %s18
    %p20 = scmp.eq.s32.totalorder %s19, 0
    %s22 = sadd.s32 %s21, 1
    %s23 = scalar_select %p20, %s21, %s22
    %p26 = pneg %p20
    %p27 = scmp.eq.s32.totalorder %s11, 1
    %p28 = por %p26, %p27
    %p29 = scmp.ne.s32.totalorder %s21, %s24
    %p30 = scmp.eq.s32.totalorder %s11, 0
    %p31 = por %p29, %p30
    %p32 = scmp.ne.s32.totalorder %s21, %s24
    %p33 = scmp.eq.s32.totalorder %s16, 1
    %p34 = por %p32, %p33
    %p35 = scmp.ne.s32.totalorder %s24, %s25
    %p36 = scmp.eq.s32.totalorder %s16, 0
    %p37 = por %p35, %p36
    %p38 = scmp.ne.s32.totalorder %s24, %s25
    %p39 = scmp.eq.s32.totalorder %s17, 1
    %p40 = por %p38, %p39
    %p42 = scmp.ne.s32.totalorder %s25, %s41
    %p43 = scmp.eq.s32.totalorder %s17, 0
    %p44 = por %p42, %p43
    %s46 = sadd.s32 %s45, 1
    %p49 = scmp.eq.s32.totalorder %s11, 1
    %p50 = scmp.ne.s32.totalorder %s45, %s47
    %p51 = scmp.eq.s32.totalorder %s11, 0
    %p52 = por %p50, %p51
    %p53 = scmp.ne.s32.totalorder %s45, %s47
    %p54 = scmp.eq.s32.totalorder %s16, 1
    %p55 = por %p53, %p54
    %p56 = scmp.ne.s32.totalorder %s47, %s48
    %p57 = scmp.eq.s32.totalorder %s16, 0
    %p58 = por %p56, %p57
    %p59 = scmp.ne.s32.totalorder %s47, %s48
    %p60 = scmp.eq.s32.totalorder %s17, 1
    %p61 = por %p59, %p60
    %p63 = scmp.ne.s32.totalorder %s48, %s62
    %p64 = scmp.eq.s32.totalorder %s17, 0
    %p65 = por %p63, %p64
    %s67 = sadd.s32 %s66, 1
    %p70 = scmp.eq.s32.totalorder %s11, 1
    %p71 = scmp.ne.s32.totalorder %s66, %s68
    %p72 = scmp.eq.s32.totalorder %s11, 0
    %p73 = por %p71, %p72
    %p74 = scmp.ne.s32.totalorder %s66, %s68
    %p75 = scmp.eq.s32.totalorder %s16, 1
    %p76 = por %p74, %p75
    %p77 = scmp.ne.s32.totalorder %s68, %s69
    %p78 = scmp.eq.s32.totalorder %s16, 0
    %p79 = por %p77, %p78
    %p80 = scmp.ne.s32.totalorder %s68, %s69
    %p81 = scmp.eq.s32.totalorder %s17, 1
    %p82 = por %p80, %p81
    %p84 = scmp.ne.s32.totalorder %s69, %s83
    %p85 = scmp.eq.s32.totalorder %s17, 0
    %p86 = por %p84, %p85
    %s88 = sadd.s32 %s87, 1
    %p91 = scmp.eq.s32.totalorder %s11, 1
    %p92 = scmp.ne.s32.totalorder %s87, %s89
    %p93 = scmp.eq.s32.totalorder %s11, 0
    %p94 = por %p92, %p93
    %p95 = scmp.ne.s32.totalorder %s87, %s89
    %p96 = scmp.eq.s32.totalorder %s16, 1
    %p97 = por %p95, %p96
    %p98 = scmp.ne.s32.totalorder %s89, %s90
    %p99 = scmp.eq.s32.totalorder %s16, 0
    %p100 = por %p98, %p99
    %p101 = scmp.ne.s32.totalorder %s89, %s90
    %p102 = scmp.eq.s32.totalorder %s17, 1
    %p103 = por %p101, %p102
    %p105 = scmp.ne.s32.totalorder %s90, %s104
    %p106 = scmp.eq.s32.totalorder %s17, 0
    %p107 = por %p105, %p106
    %s109 = sadd.s32 %s108, 1
    %p112 = scmp.eq.s32.totalorder %s11, 1
    %p113 = scmp.ne.s32.totalorder %s108, %s110
    %p114 = scmp.eq.s32.totalorder %s11, 0
    %p115 = por %p113, %p114
    %p116 = scmp.ne.s32.totalorder %s108, %s110
    %p117 = scmp.eq.s32.totalorder %s16, 1
    %p118 = por %p116, %p117
    %p119 = scmp.ne.s32.totalorder %s110, %s111
    %p120 = scmp.eq.s32.totalorder %s16, 0
    %p121 = por %p119, %p120
    %p122 = scmp.ne.s32.totalorder %s110, %s111
    %p123 = scmp.eq.s32.totalorder %s17, 1
    %p124 = por %p122, %p123
    %p126 = scmp.ne.s32.totalorder %s111, %s125
    %p127 = scmp.eq.s32.totalorder %s17, 0
    %p128 = por %p126, %p127
    %s129 = ssub.s32 %s11, %s18
    %p130 = scmp.eq.s32.totalorder %s129, 0
    %s132 = sadd.s32 %s131, 1
    %s133 = scalar_select %p130, %s131, %s132
    %p136 = pneg %p130
    %p137 = scmp.eq.s32.totalorder %s11, 1
    %p138 = por %p136, %p137
    %p139 = scmp.ne.s32.totalorder %s131, %s134
    %p140 = scmp.eq.s32.totalorder %s11, 0
    %p141 = por %p139, %p140
    %p142 = scmp.ne.s32.totalorder %s131, %s134
    %p143 = scmp.eq.s32.totalorder %s16, 1
    %p144 = por %p142, %p143
    %p145 = scmp.ne.s32.totalorder %s134, %s135
    %p146 = scmp.eq.s32.totalorder %s16, 0
    %p147 = por %p145, %p146
    %p148 = scmp.ne.s32.totalorder %s134, %s135
    %p149 = scmp.eq.s32.totalorder %s17, 1
    %p150 = por %p148, %p149
    %p152 = scmp.ne.s32.totalorder %s135, %s151
    %p153 = scmp.eq.s32.totalorder %s17, 0
    %p154 = por %p152, %p153
    %p155 = scmp.le.s32.totalorder 1, %s11
    %p156 = scmp.lt.s32.totalorder %s11, 3
    %p157 = pnand %p155, %p156
    %p158 = pneg %p157
    // Predicated region
    $region9: #{tpu_custom_call.1} parent=5 // pred_check
      _
    $region10: #{tpu_custom_call.1} parent=5 // pred_check_branch
      %160 = sbr.rel (%p157) target = $region12
    $region11: #{tpu_custom_call.1} parent=5 // pred_region
      %s161 = ssub.s32 %s11, 1
      // Predicated region
      $region13: #{tpu_custom_call.1} parent=11 // pred_check
        %p162 = pneg %p58
      $region14: #{tpu_custom_call.1} parent=11 // pred_check_branch
        %164 = sbr.rel (%p162) target = $region16
      $region15: #{tpu_custom_call.1} parent=11 // pred_region
        _
      $region16: #{tpu_custom_call.1} parent=11 // pred_fallthru
        _
      // Predicated region
      $region17: #{tpu_custom_call.1} parent=11 // pred_check
        %p165 = pneg %p79
      $region18: #{tpu_custom_call.1} parent=11 // pred_check_branch
        %167 = sbr.rel (%p165) target = $region20
      $region19: #{tpu_custom_call.1} parent=11 // pred_region
        _
      $region20: #{tpu_custom_call.1} parent=11 // pred_fallthru
        _
      // Predicated region
      $region21: #{tpu_custom_call.1} parent=11 // pred_check
        %p168 = pneg %p100
      $region22: #{tpu_custom_call.1} parent=11 // pred_check_branch
        %170 = sbr.rel (%p168) target = $region24
      $region23: #{tpu_custom_call.1} parent=11 // pred_region
        _
      $region24: #{tpu_custom_call.1} parent=11 // pred_fallthru
        _
      // Predicated region
      $region25: #{tpu_custom_call.1} parent=11 // pred_check
        %p171 = pneg %p121
      $region26: #{tpu_custom_call.1} parent=11 // pred_check_branch
        %173 = sbr.rel (%p171) target = $region28
      $region27: #{tpu_custom_call.1} parent=11 // pred_region
        _
      $region28: #{tpu_custom_call.1} parent=11 // pred_fallthru
        _
    $region12: #{tpu_custom_call.1} parent=5 // pred_fallthru
      _
    %p174 = scmp.lt.s32.totalorder %s11, 2
    // Predicated region
    $region29: #{tpu_custom_call.1} parent=5 // pred_check
      %p175 = pneg %p174
    $region30: #{tpu_custom_call.1} parent=5 // pred_check_branch
      %177 = sbr.rel (%p175) target = $region32
    $region31: #{tpu_custom_call.1} parent=5 // pred_region
      // Predicated region
      $region33: #{tpu_custom_call.1} parent=31 // pred_check
        %p178 = pneg %p31
      $region34: #{tpu_custom_call.1} parent=31 // pred_check_branch
        %180 = sbr.rel (%p178) target = $region36
      $region35: #{tpu_custom_call.1} parent=31 // pred_region
        %p181 = scmp.lt.s32.totalorder %s11, 1
        %s182 = scalar_select %p181, %s11, 1
        %s183 = smul.addr %s182, 8
        %s184 = scalar_lea.vmem %s0, %s183
      $region36: #{tpu_custom_call.1} parent=31 // pred_fallthru
        _
    $region32: #{tpu_custom_call.1} parent=5 // pred_fallthru
      _
    %p185 = scmp.le.s32.totalorder 1, %s11
    %p186 = scmp.lt.s32.totalorder %s11, 3
    %p187 = pnand %p185, %p186
    %p188 = pneg %p187
    // Predicated region
    $region37: #{tpu_custom_call.1} parent=5 // pred_check
      _
    $region38: #{tpu_custom_call.1} parent=5 // pred_check_branch
      %190 = sbr.rel (%p187) target = $region40
    $region39: #{tpu_custom_call.1} parent=5 // pred_region
      %s191 = ssub.s32 %s11, 1
      %p192 = scmp.lt.s32.totalorder %s16, 1
      %s193 = scalar_select %p192, %s16, 1
      %s194 = smul.addr %s193, 8
      %s195 = scalar_lea.vmem %s0, %s194
      %p196 = pneg %p37
      %p197 = pneg %p34
      %p198 = pneg %p58
      %p199 = pneg %p55
      %p200 = pneg %p79
      %p201 = pneg %p76
      %p202 = pneg %p100
      %p203 = pneg %p97
      %p204 = pneg %p121
      %p205 = pneg %p118
      %p206 = pneg %p147
      %p207 = pneg %p144
      %p208 = scmp.lt.s32.totalorder %s16, 1
      %s209 = scalar_select %p208, %s16, 1
      %s210 = smul.addr %s209, 8
      %s211 = scalar_lea.vmem %s5, %s210
      %p212 = scmp.lt.s32.totalorder %s16, 1
      %s213 = scalar_select %p212, %s16, 1
      %s214 = smul.addr %s213, 8
      %s215 = scalar_lea.vmem %s0, %s214
      %p216 = scmp.lt.s32.totalorder %s16, 1
      %s217 = scalar_select %p216, %s16, 1
      %s218 = smul.addr %s217, 8
      %s219 = scalar_lea.vmem %s5, %s218
      %v220 = vld [vmem:[%s215] sm:$0xff]
      %v221 = vld [vmem:[%s1] sm:$0xff]
      %v222 = vld [vmem:[%s1 + $0x8] sm:$0xff]
      %v223 = vld [vmem:[%s1 + $0x10] sm:$0xff]
      %v224 = vld [vmem:[%s1 + $0x18] sm:$0xff]
      %v225 = vld [vmem:[%s1 + $0x20] sm:$0xff]
      %v226 = vld [vmem:[%s1 + $0x28] sm:$0xff]
      %v227 = vld [vmem:[%s1 + $0x30] sm:$0xff]
      %v228 = vld [vmem:[%s1 + $0x38] sm:$0xff]
      %v229 = vld [vmem:[%s2] sm:$0x1]
      %v231 = vperm.slane %v229, 0
      %vm233 = vcmask 523264
      %v235 = vsel %vm233, %v220, 0
      %237 = vmatpush.msra.mxu0 0.0
      %238 = vmatpush.msra.mxu0 0.0
      %239 = vmatpush.msra.mxu0 0.0
      %240 = vmatpush.msra.mxu0 0.0
      %241 = vmatpush.msra.mxu0 0.0
      %242 = vmatpush.msra.mxu0 0.0
      %243 = vmatpush.msra.mxu0 0.0
      %244 = vmatpush.msra.mxu0 0.0
      %245 = vmatpush.msra.mxu0 %v228
      %246 = vmatpush.msra.mxu0 %v227
      %247 = vmatpush.msra.mxu0 %v226
      %248 = vmatpush.msra.mxu0 %v225
      %249 = vmatpush.msra.mxu0 %v224
      %250 = vmatpush.msra.mxu0 %v223
      %251 = vmatpush.msra.mxu0 %v222
      %252 = vmatpush.msra.mxu0 %v221
      %253 = vmatmul.f32.gmra.mxu0 %v235
      %v254 = vpop.f32.mrf.mxu0
      %v255 = vadd.f32 %v231, %v254
      %256 = vdwg.mxu0
      %v257 = vmax.f32 %v255, 0.0
      %v258 = vld [vmem:[%s3] sm:$0xff]
      %v259 = vld [vmem:[%s3 + $0x8] sm:$0xff]
      %v260 = vld [vmem:[%s3 + $0x10] sm:$0xff]
      %v261 = vld [vmem:[%s3 + $0x18] sm:$0xff]
      %v262 = vld [vmem:[%s4] sm:$0x1]
      %v264 = vperm.slane %v262, 0
      %vm266 = vcmask 261120
      %v268 = vsel %vm266, %v257, 0
      %270 = vmatpush.msra.mxu0 0.0
      %271 = vmatpush.msra.mxu0 0.0
      %272 = vmatpush.msra.mxu0 0.0
      %273 = vmatpush.msra.mxu0 0.0
      %274 = vmatpush.msra.mxu0 0.0
      %275 = vmatpush.msra.mxu0 0.0
      %276 = vmatpush.msra.mxu0 0.0
      %277 = vmatpush.msra.mxu0 0.0
      %278 = vmatpush.msra.mxu0 0.0
      %279 = vmatpush.msra.mxu0 0.0
      %280 = vmatpush.msra.mxu0 0.0
      %281 = vmatpush.msra.mxu0 0.0
      %282 = vmatpush.msra.mxu0 %v261
      %283 = vmatpush.msra.mxu0 %v260
      %284 = vmatpush.msra.mxu0 %v259
      %285 = vmatpush.msra.mxu0 %v258
      %286 = vmatmul.f32.gmra.mxu0 %v268
      %v287 = vpop.f32.mrf.mxu0
      %v288 = vadd.f32 %v264, %v287
      %289 = vdwg.mxu0
      %vm290 = vcmask 31744
      %291 = vst.msk [vmem:[%s219] sm:$0xff] %vm290, %v288
      %p292 = scmp.lt.s32.totalorder %s16, 1
      %s293 = scalar_select %p292, %s16, 1
      %s294 = smul.addr %s293, 8
      %s295 = scalar_lea.vmem %s5, %s294
      // Predicated region
      $region41: #{tpu_custom_call.1} parent=39 // pred_check
        %p296 = pneg %p144
      $region42: #{tpu_custom_call.1} parent=39 // pred_check_branch
        %298 = sbr.rel (%p296) target = $region44
      $region43: #{tpu_custom_call.1} parent=39 // pred_region
        _
      $region44: #{tpu_custom_call.1} parent=39 // pred_fallthru
        _
    $region40: #{tpu_custom_call.1} parent=5 // pred_fallthru
      _
    %p299 = scmp.le.s32.totalorder 2, %s11
    // Predicated region
    $region45: #{tpu_custom_call.1} parent=5 // pred_check
      %p300 = pneg %p299
    $region46: #{tpu_custom_call.1} parent=5 // pred_check_branch
      %302 = sbr.rel (%p300) target = $region48
    $region47: #{tpu_custom_call.1} parent=5 // pred_region
      %s303 = ssub.s32 %s11, 2
      // Predicated region
      $region49: #{tpu_custom_call.1} parent=47 // pred_check
        %p304 = pneg %p150
      $region50: #{tpu_custom_call.1} parent=47 // pred_check_branch
        %306 = sbr.rel (%p304) target = $region52
      $region51: #{tpu_custom_call.1} parent=47 // pred_region
        %p307 = scmp.lt.s32.totalorder %s17, 1
        %s308 = scalar_select %p307, %s17, 1
        %s309 = smul.addr %s308, 8
        %s310 = scalar_lea.vmem %s5, %s309
      $region52: #{tpu_custom_call.1} parent=47 // pred_fallthru
        _
    $region48: #{tpu_custom_call.1} parent=5 // pred_fallthru
      _
  $region6: #{tpu_custom_call.1} parent=0 // loop_footer
    %s15 = sadd.s32 1, %s11
  $region7: #{tpu_custom_call.1} parent=0 // loop_footer_branch
    %10 = sbr.rel target = $region3
  $region8: #{tpu_custom_call.1} parent=0 // loop_exit
    _

</llo_original>
